<compile_context>
chip_gen: v6e
topology: v6e:2x2x1
jax: 0.10.0
libtpu: 0.0.40
codegen_flags: <defaults>
</compile_context>

<pallas_src>
import functools

import jax
import jax.numpy as jnp
from jax.experimental import pallas as pl
from jax.experimental.pallas import tpu as pltpu


def _round_up(x, m):
    return (x + m - 1) // m * m


def _ffn_kernel(x_ref, mask_ref, w1_ref, b1_ref, w2_ref, b2_ref, out_ref, *,
                seq_len, kernel_size, pad_left, activation, matmul_dtype):
    Rb = x_ref.shape[0]                       # rows this step (block_b * T_p)
    K = kernel_size

    mask = mask_ref[...]                      # (Rb, 1) f32
    x = x_ref[...] * mask                     # (Rb, Cin_p) f32, masked input

    # Per-row time index within its own (padded) sequence.  The K edge
    # validity masks are identical for conv_1 and conv_2 -> compute once.
    t_idx = jax.lax.broadcasted_iota(jnp.int32, (Rb, 1), 0) % seq_len
    valid = []
    for k in range(K):
        s = k - pad_left
        if s == 0:
            valid.append(None)
        else:
            valid.append(jnp.logical_and(t_idx + s >= 0, t_idx + s < seq_len))

    def conv(inp, w_ref, b_ref):
        # im2col: K time-shifted taps (rows that would read across a sequence
        # edge are zeroed, matching the reference conv's zero padding),
        # concatenated along lanes -> one (Rb, K*C_in) @ (K*C_in, C_out)
        # MXU matmul with f32 accumulation.
        taps = []
        for k in range(K):
            s = k - pad_left
            if s == 0:
                tap = inp
            else:
                tap = pltpu.roll(inp, shift=(-s) % Rb, axis=0)
                tap = jnp.where(valid[k], tap, 0.0)
            taps.append(tap)
        cols = taps[0] if K == 1 else jnp.concatenate(taps, axis=1)
        acc = jnp.dot(cols.astype(matmul_dtype), w_ref[...],
                      preferred_element_type=jnp.float32)
        return acc + b_ref[...]               # (1, C_out) 2-D broadcast

    # ---- conv_1 -----------------------------------------------------------
    h = conv(x, w1_ref, b1_ref)

    # ---- activation (dropout is identity in eval / p_dropout=0) ------------
    # TODO(synk): dropout (p_dropout > 0, training mode) not implemented.
    if activation == "gelu":
        h = h * jax.nn.sigmoid(1.702 * h)
    else:
        h = jnp.maximum(h, 0.0)
    h = h * mask

    # ---- conv_2 -----------------------------------------------------------
    o = conv(h, w2_ref, b2_ref)

    out_ref[...] = (o * mask).astype(out_ref.dtype)


def ffn_pallas(x, x_mask, w1, b1, w2, b2, *, kernel_size, causal=False,
               activation=None, block_b=None, matmul_dtype=jnp.bfloat16,
               lane_pad=128):
    """Fused FFN forward (eval mode).

    x      : (B, T, Cin)  f32   (time-major; transpose of PyTorch NCT)
    x_mask : (B, T, 1)    f32
    w1     : (K, Cin, F)  = torch conv_1.weight.transpose(2, 1, 0)
    b1     : (F,)
    w2     : (K, F, Cout) = torch conv_2.weight.transpose(2, 1, 0)
    b2     : (Cout,)
    """
    B, T, Cin = x.shape
    K = kernel_size
    F_ = w1.shape[2]
    Cout = w2.shape[2]

    if K == 1:
        pad_left = 0
    elif causal:
        pad_left = K - 1
    else:
        pad_left = (K - 1) // 2

    # ---- wrapper-side layout plumbing --------------------------------------
    # Lane-dense channels: zero-pad Cin / F / Cout to multiples of `lane_pad`
    # (padded lanes contribute nothing and are sliced off at the end).
    Cin_p, F_p, Cout_p = (_round_up(c, lane_pad) for c in (Cin, F_, Cout))
    # Sublane-aligned sequence length; extra rows carry mask == 0 so they act
    # exactly like the conv's zero padding and produce zero output.
    T_p = _round_up(T, 8)

    # Rows per grid step: target ~2048 rows (>=512 needed for the HBM
    # roofline; ~0.35us fixed cost per grid step), but keep >= 2 grid steps
    # when B >= 2 so the "parallel" axis can shard across v7x's 2 TensorCores.
    if block_b is None:
        block_b = max(1, 2048 // T_p)
        if B >= 2:
            block_b = min(block_b, (B + 1) // 2)
    block_b = max(1, min(block_b, B))

    # ---- per-generation VMEM budget ----------------------------------------
    msz = jnp.dtype(matmul_dtype).itemsize

    def vmem_estimate(bb):
        rows = bb * T_p
        act = 2 * 4 * rows * (Cin_p + 128 + Cout_p)            # x/mask/out, 2-buf
        wgt = 2 * (msz * K * (Cin_p * F_p + F_p * Cout_p)
                   + 4 * (F_p + Cout_p))                        # weights + biases
        tmp = rows * (4 * (Cin_p + F_p + Cout_p)                # x, h, o (f32)
                      + msz * K * (Cin_p + F_p))                # im2col columns
        return act + wgt + tmp

    try:
        vmem_cap = int(pltpu.get_tpu_info().vmem_capacity_bytes)
    except Exception:
        vmem_cap = 64 << 20                                     # v7x worst case
    budget = int(0.8 * vmem_cap)
    while block_b > 1 and vmem_estimate(block_b) > budget:
        block_b = max(1, block_b // 2)
    vmem_limit = int(min(vmem_cap,
                         max(vmem_estimate(block_b) + (4 << 20), 16 << 20)))

    B_p = _round_up(B, block_b)
    nb = B_p // block_b
    Rb = block_b * T_p

    # Flatten + pad activations once here (layout plumbing, not compute).
    xp = jnp.zeros((B_p, T_p, Cin_p), x.dtype).at[:B, :T, :Cin].set(x)
    mp = jnp.zeros((B_p, T_p, 1), x_mask.dtype).at[:B, :T].set(x_mask)
    x2 = xp.reshape(B_p * T_p, Cin_p)
    m2 = mp.reshape(B_p * T_p, 1)

    # Pad weights, fold the K taps into the contraction dim, cast to the
    # matmul dtype (accumulation stays f32 inside the kernel).
    w1p = jnp.zeros((K, Cin_p, F_p), matmul_dtype).at[:, :Cin, :F_].set(
        w1.astype(matmul_dtype)).reshape(K * Cin_p, F_p)
    w2p = jnp.zeros((K, F_p, Cout_p), matmul_dtype).at[:, :F_, :Cout].set(
        w2.astype(matmul_dtype)).reshape(K * F_p, Cout_p)
    b1p = jnp.zeros((1, F_p), jnp.float32).at[0, :F_].set(b1)
    b2p = jnp.zeros((1, Cout_p), jnp.float32).at[0, :Cout].set(b2)

    kernel = functools.partial(
        _ffn_kernel, seq_len=T_p, kernel_size=K, pad_left=pad_left,
        activation=activation, matmul_dtype=matmul_dtype)

    out2 = pl.pallas_call(
        kernel,
        out_shape=jax.ShapeDtypeStruct((B_p * T_p, Cout_p), x.dtype),
        grid=(nb,),
        in_specs=[
            pl.BlockSpec((Rb, Cin_p), lambda b: (b, 0)),
            pl.BlockSpec((Rb, 1), lambda b: (b, 0)),
            # Constant index maps -> weights stay VMEM-resident across steps.
            pl.BlockSpec((K * Cin_p, F_p), lambda b: (0, 0)),
            pl.BlockSpec((1, F_p), lambda b: (0, 0)),
            pl.BlockSpec((K * F_p, Cout_p), lambda b: (0, 0)),
            pl.BlockSpec((1, Cout_p), lambda b: (0, 0)),
        ],
        out_specs=pl.BlockSpec((Rb, Cout_p), lambda b: (b, 0)),
        compiler_params=pltpu.CompilerParams(
            dimension_semantics=("parallel",),        # batches independent
            vmem_limit_bytes=vmem_limit),
    )(x2, m2, w1p, b1p, w2p, b2p)

    return out2.reshape(B_p, T_p, Cout_p)[:B, :T, :Cout]


def ffn_ref(x, x_mask, w1, b1, w2, b2, *, kernel_size, causal=False,
            activation=None):
    """Pure-JAX reference matching the PyTorch FFN.forward (eval mode)."""
    K = kernel_size
    T = x.shape[1]
    if K == 1:
        pl_, pr_ = 0, 0
    elif causal:
        pl_, pr_ = K - 1, 0
    else:
        pl_, pr_ = (K - 1) // 2, K // 2

    xm = x * x_mask
    xp = jnp.pad(xm, ((0, 0), (pl_, pr_), (0, 0)))
    h = b1[None, None, :] + sum(
        jnp.einsum("btc,cf->btf", xp[:, k:k + T], w1[k]) for k in range(K))
    if activation == "gelu":
        h = h * jax.nn.sigmoid(1.702 * h)
    else:
        h = jnp.maximum(h, 0.0)
    h = h * x_mask
    hp = jnp.pad(h, ((0, 0), (pl_, pr_), (0, 0)))
    o = b2[None, None, :] + sum(
        jnp.einsum("btf,fo->bto", hp[:, k:k + T], w2[k]) for k in range(K))
    return o * x_mask


if __name__ == "__main__":
    # Module config: FFN(in_channels=4, out_channels=4, filter_channels=32,
    #                    kernel_size=3, activation=None, causal=False)
    B, T = 2, 16
    Cin, Cout, F_, K = 4, 4, 32, 3

    key = jax.random.PRNGKey(0)
    kx, kw1, kb1, kw2, kb2 = jax.random.split(key, 5)

    x = jax.random.normal(kx, (B, T, Cin), jnp.float32)
    lengths = jnp.array([16, 10], jnp.int32)
    x_mask = (jnp.arange(T)[None, :] < lengths[:, None]).astype(
        jnp.float32)[:, :, None]                          # (B, T, 1)

    # Parameters stored as (K, Cin, Cout) == torch_weight.transpose(2, 1, 0).
    w1 = jax.random.normal(kw1, (K, Cin, F_), jnp.float32) * 0.1
    b1 = jax.random.normal(kb1, (F_,), jnp.float32) * 0.1
    w2 = jax.random.normal(kw2, (K, F_, Cout), jnp.float32) * 0.1
    b2 = jax.random.normal(kb2, (Cout,), jnp.float32) * 0.1

    ref = ffn_ref(x, x_mask, w1, b1, w2, b2, kernel_size=K,
                  causal=False, activation=None)

    # 1) Production path: bf16 matmul operands, f32 accumulation.
    out_bf16 = jax.block_until_ready(
        ffn_pallas(x, x_mask, w1, b1, w2, b2, kernel_size=K,
                   causal=False, activation=None,
                   matmul_dtype=jnp.bfloat16))
    assert out_bf16.shape == (B, T, Cout)
    assert jnp.allclose(out_bf16, ref, atol=5e-2, rtol=5e-2), \
        float(jnp.max(jnp.abs(out_bf16 - ref)))

    # 2) Exactness check: f32 matmul path against the f32 reference.
    out_f32 = jax.block_until_ready(
        ffn_pallas(x, x_mask, w1, b1, w2, b2, kernel_size=K,
                   causal=False, activation=None,
                   matmul_dtype=jnp.float32))
    assert jnp.allclose(out_f32, ref, atol=1e-5, rtol=1e-5), \
        float(jnp.max(jnp.abs(out_f32 - ref)))

    # 3) gelu / causal coverage (f32 matmul, tight tolerance).
    out_gc = jax.block_until_ready(
        ffn_pallas(x, x_mask, w1, b1, w2, b2, kernel_size=K,
                   causal=True, activation="gelu",
                   matmul_dtype=jnp.float32))
    ref_gc = ffn_ref(x, x_mask, w1, b1, w2, b2, kernel_size=K,
                     causal=True, activation="gelu")
    assert jnp.allclose(out_gc, ref_gc, atol=1e-5, rtol=1e-5), \
        float(jnp.max(jnp.abs(out_gc - ref_gc)))

    print("KERNEL_OK")
</pallas_src>

<mosaic_0001>
module attributes {stable_mosaic.version = 11 : i64} {
  func.func @_ffn_kernel(%arg0: i32, %arg1: memref<16x128xf32, #tpu.memory_space<vmem>>, %arg2: memref<16x1xf32, #tpu.memory_space<vmem>>, %arg3: memref<384x128xbf16, #tpu.memory_space<vmem>>, %arg4: memref<1x128xf32, #tpu.memory_space<vmem>>, %arg5: memref<384x128xbf16, #tpu.memory_space<vmem>>, %arg6: memref<1x128xf32, #tpu.memory_space<vmem>>, %arg7: memref<16x128xf32, #tpu.memory_space<vmem>>) attributes {dimension_semantics = [#tpu.dimension_semantics<parallel>], iteration_bounds = array<i64: 2>, scalar_prefetch = 0 : i64, scratch_operands = 0 : i64, tpu.core_type = #tpu.core_type<tc>, window_params = [{transform_indices = @transform_0, window_bounds = array<i64: 16, 128>}, {transform_indices = @transform_1, window_bounds = array<i64: 16, 1>}, {pipeline_mode = #tpu.pipeline_mode<synchronous>, transform_indices = @transform_2, window_bounds = array<i64: 384, 128>}, {pipeline_mode = #tpu.pipeline_mode<synchronous>, transform_indices = @transform_3, window_bounds = array<i64: 1, 128>}, {pipeline_mode = #tpu.pipeline_mode<synchronous>, transform_indices = @transform_4, window_bounds = array<i64: 384, 128>}, {pipeline_mode = #tpu.pipeline_mode<synchronous>, transform_indices = @transform_5, window_bounds = array<i64: 1, 128>}, {transform_indices = @transform_6, window_bounds = array<i64: 16, 128>}]} {
    %c0 = arith.constant 0 : index
    %c0_0 = arith.constant 0 : index
    %0 = vector.load %arg2[%c0, %c0_0] : memref<16x1xf32, #tpu.memory_space<vmem>>, vector<16x1xf32>
    %c0_1 = arith.constant 0 : index
    %c0_2 = arith.constant 0 : index
    %1 = vector.load %arg1[%c0_1, %c0_2] : memref<16x128xf32, #tpu.memory_space<vmem>>, vector<16x128xf32>
    %2 = vector.broadcast %0 : vector<16x1xf32> to vector<16x128xf32>
    %3 = arith.mulf %1, %2 : vector<16x128xf32>
    %4 = tpu.iota {dimensions = array<i32: 0>} : vector<16x1xi32>
    %c16_i32 = arith.constant 16 : i32
    %c0_i32 = arith.constant 0 : i32
    %5 = arith.cmpi eq, %c16_i32, %c0_i32 : i32
    %c1_i32 = arith.constant 1 : i32
    %6 = arith.select %5, %c1_i32, %c16_i32 : i32
    %7 = vector.broadcast %6 : i32 to vector<16x1xi32>
    %8 = arith.remsi %4, %7 : vector<16x1xi32>
    %c0_i32_3 = arith.constant 0 : i32
    %9 = vector.broadcast %c0_i32_3 : i32 to vector<16x1xi32>
    %10 = arith.cmpi ne, %8, %9 : vector<16x1xi32>
    %c0_i32_4 = arith.constant 0 : i32
    %11 = vector.broadcast %c0_i32_4 : i32 to vector<16x1xi32>
    %12 = arith.cmpi slt, %8, %11 : vector<16x1xi32>
    %c0_i32_5 = arith.constant 0 : i32
    %13 = arith.cmpi slt, %6, %c0_i32_5 : i32
    %14 = vector.broadcast %13 : i1 to vector<16x1xi1>
    %15 = vector.broadcast %14 : vector<16x1xi1> to vector<16x1xi1>
    %16 = arith.xori %12, %15 : vector<16x1xi1>
    %17 = arith.andi %16, %10 : vector<16x1xi1>
    %18 = vector.broadcast %6 : i32 to vector<16x1xi32>
    %19 = arith.addi %8, %18 : vector<16x1xi32>
    %20 = arith.select %17, %19, %8 : vector<16x1xi1>, vector<16x1xi32>
    %c-1_i32 = arith.constant -1 : i32
    %21 = vector.broadcast %c-1_i32 : i32 to vector<16x1xi32>
    %22 = arith.addi %20, %21 : vector<16x1xi32>
    %c0_i32_6 = arith.constant 0 : i32
    %23 = vector.broadcast %c0_i32_6 : i32 to vector<16x1xi32>
    %24 = arith.cmpi sge, %22, %23 : vector<16x1xi32>
    %c-1_i32_7 = arith.constant -1 : i32
    %25 = vector.broadcast %c-1_i32_7 : i32 to vector<16x1xi32>
    %26 = arith.addi %20, %25 : vector<16x1xi32>
    %c16_i32_8 = arith.constant 16 : i32
    %27 = vector.broadcast %c16_i32_8 : i32 to vector<16x1xi32>
    %28 = arith.cmpi slt, %26, %27 : vector<16x1xi32>
    %29 = arith.andi %24, %28 : vector<16x1xi1>
    %c1_i32_9 = arith.constant 1 : i32
    %30 = vector.broadcast %c1_i32_9 : i32 to vector<16x1xi32>
    %31 = arith.addi %20, %30 : vector<16x1xi32>
    %c0_i32_10 = arith.constant 0 : i32
    %32 = vector.broadcast %c0_i32_10 : i32 to vector<16x1xi32>
    %33 = arith.cmpi sge, %31, %32 : vector<16x1xi32>
    %c1_i32_11 = arith.constant 1 : i32
    %34 = vector.broadcast %c1_i32_11 : i32 to vector<16x1xi32>
    %35 = arith.addi %20, %34 : vector<16x1xi32>
    %c16_i32_12 = arith.constant 16 : i32
    %36 = vector.broadcast %c16_i32_12 : i32 to vector<16x1xi32>
    %37 = arith.cmpi slt, %35, %36 : vector<16x1xi32>
    %38 = arith.andi %33, %37 : vector<16x1xi1>
    %c1_i32_13 = arith.constant 1 : i32
    %39 = tpu.dynamic_rotate %3 by %c1_i32_13 dim 0 : vector<16x128xf32>, i32 -> vector<16x128xf32>
    %cst = arith.constant 0.000000e+00 : f32
    %40 = vector.shape_cast %29 : vector<16x1xi1> to vector<16x1xi1>
    %41 = vector.broadcast %40 : vector<16x1xi1> to vector<16x128xi1>
    %42 = vector.broadcast %cst : f32 to vector<16x128xf32>
    %43 = arith.select %41, %39, %42 : vector<16x128xi1>, vector<16x128xf32>
    %c15_i32 = arith.constant 15 : i32
    %44 = tpu.dynamic_rotate %3 by %c15_i32 dim 0 : vector<16x128xf32>, i32 -> vector<16x128xf32>
    %cst_14 = arith.constant 0.000000e+00 : f32
    %45 = vector.shape_cast %38 : vector<16x1xi1> to vector<16x1xi1>
    %46 = vector.broadcast %45 : vector<16x1xi1> to vector<16x128xi1>
    %47 = vector.broadcast %cst_14 : f32 to vector<16x128xf32>
    %48 = arith.select %46, %44, %47 : vector<16x128xi1>, vector<16x128xf32>
    %49 = tpu.concatenate %43, %3, %48 in 1 : vector<16x128xf32>, vector<16x128xf32>, vector<16x128xf32> -> vector<16x384xf32>
    %50 = arith.truncf %49 : vector<16x384xf32> to vector<16x384xbf16>
    %c0_15 = arith.constant 0 : index
    %c0_16 = arith.constant 0 : index
    %51 = vector.load %arg3[%c0_15, %c0_16] : memref<384x128xbf16, #tpu.memory_space<vmem>>, vector<384x128xbf16>
    %cst_17 = arith.constant dense<0.000000e+00> : vector<16x128xf32>
    %52 = tpu.matmul %50, %51, %cst_17 {dimension_numbers = #tpu.dot_dimension_numbers<[1], [0], [0], [1], [0, 0, 1, 1], [], []>} : vector<16x384xbf16>, vector<384x128xbf16>, vector<16x128xf32> -> vector<16x128xf32>
    %c0_18 = arith.constant 0 : index
    %c0_19 = arith.constant 0 : index
    %53 = vector.load %arg4[%c0_18, %c0_19] : memref<1x128xf32, #tpu.memory_space<vmem>>, vector<1x128xf32>
    %54 = vector.broadcast %53 : vector<1x128xf32> to vector<16x128xf32>
    %55 = arith.addf %52, %54 : vector<16x128xf32>
    %cst_20 = arith.constant 0.000000e+00 : f32
    %56 = vector.broadcast %cst_20 : f32 to vector<16x128xf32>
    %57 = arith.maximumf %55, %56 : vector<16x128xf32>
    %58 = vector.broadcast %0 : vector<16x1xf32> to vector<16x128xf32>
    %59 = arith.mulf %57, %58 : vector<16x128xf32>
    %c1_i32_21 = arith.constant 1 : i32
    %60 = tpu.dynamic_rotate %59 by %c1_i32_21 dim 0 : vector<16x128xf32>, i32 -> vector<16x128xf32>
    %cst_22 = arith.constant 0.000000e+00 : f32
    %61 = vector.shape_cast %29 : vector<16x1xi1> to vector<16x1xi1>
    %62 = vector.broadcast %61 : vector<16x1xi1> to vector<16x128xi1>
    %63 = vector.broadcast %cst_22 : f32 to vector<16x128xf32>
    %64 = arith.select %62, %60, %63 : vector<16x128xi1>, vector<16x128xf32>
    %c15_i32_23 = arith.constant 15 : i32
    %65 = tpu.dynamic_rotate %59 by %c15_i32_23 dim 0 : vector<16x128xf32>, i32 -> vector<16x128xf32>
    %cst_24 = arith.constant 0.000000e+00 : f32
    %66 = vector.shape_cast %38 : vector<16x1xi1> to vector<16x1xi1>
    %67 = vector.broadcast %66 : vector<16x1xi1> to vector<16x128xi1>
    %68 = vector.broadcast %cst_24 : f32 to vector<16x128xf32>
    %69 = arith.select %67, %65, %68 : vector<16x128xi1>, vector<16x128xf32>
    %70 = tpu.concatenate %64, %59, %69 in 1 : vector<16x128xf32>, vector<16x128xf32>, vector<16x128xf32> -> vector<16x384xf32>
    %71 = arith.truncf %70 : vector<16x384xf32> to vector<16x384xbf16>
    %c0_25 = arith.constant 0 : index
    %c0_26 = arith.constant 0 : index
    %72 = vector.load %arg5[%c0_25, %c0_26] : memref<384x128xbf16, #tpu.memory_space<vmem>>, vector<384x128xbf16>
    %cst_27 = arith.constant dense<0.000000e+00> : vector<16x128xf32>
    %73 = tpu.matmul %71, %72, %cst_27 {dimension_numbers = #tpu.dot_dimension_numbers<[1], [0], [0], [1], [0, 0, 1, 1], [], []>} : vector<16x384xbf16>, vector<384x128xbf16>, vector<16x128xf32> -> vector<16x128xf32>
    %c0_28 = arith.constant 0 : index
    %c0_29 = arith.constant 0 : index
    %74 = vector.load %arg6[%c0_28, %c0_29] : memref<1x128xf32, #tpu.memory_space<vmem>>, vector<1x128xf32>
    %75 = vector.broadcast %74 : vector<1x128xf32> to vector<16x128xf32>
    %76 = arith.addf %73, %75 : vector<16x128xf32>
    %77 = vector.broadcast %0 : vector<16x1xf32> to vector<16x128xf32>
    %78 = arith.mulf %76, %77 : vector<16x128xf32>
    %c0_30 = arith.constant 0 : index
    %c0_31 = arith.constant 0 : index
    %79 = vector.load %arg7[%c0_30, %c0_31] : memref<16x128xf32, #tpu.memory_space<vmem>>, vector<16x128xf32>
    tpu.vector_store %arg7[%c0_30, %c0_31], %78 {strides = array<i32>} : memref<16x128xf32, #tpu.memory_space<vmem>>, vector<16x128xf32>,
    return
  }
  func.func @transform_0(%arg0: i32) -> (i32, i32) {
    %c0_i32 = arith.constant 0 : i32
    %c0_i32_0 = arith.constant 0 : i32
    return %arg0, %c0_i32 : i32, i32
  }
  func.func @transform_1(%arg0: i32) -> (i32, i32) {
    %c0_i32 = arith.constant 0 : i32
    %c0_i32_0 = arith.constant 0 : i32
    return %arg0, %c0_i32 : i32, i32
  }
  func.func @transform_2(%arg0: i32) -> (i32, i32) {
    %c0_i32 = arith.constant 0 : i32
    %c0_i32_0 = arith.constant 0 : i32
    %c0_i32_1 = arith.constant 0 : i32
    return %c0_i32, %c0_i32_0 : i32, i32
  }
  func.func @transform_3(%arg0: i32) -> (i32, i32) {
    %c0_i32 = arith.constant 0 : i32
    %c0_i32_0 = arith.constant 0 : i32
    %c0_i32_1 = arith.constant 0 : i32
    return %c0_i32, %c0_i32_0 : i32, i32
  }
  func.func @transform_4(%arg0: i32) -> (i32, i32) {
    %c0_i32 = arith.constant 0 : i32
    %c0_i32_0 = arith.constant 0 : i32
    %c0_i32_1 = arith.constant 0 : i32
    return %c0_i32, %c0_i32_0 : i32, i32
  }
  func.func @transform_5(%arg0: i32) -> (i32, i32) {
    %c0_i32 = arith.constant 0 : i32
    %c0_i32_0 = arith.constant 0 : i32
    %c0_i32_1 = arith.constant 0 : i32
    return %c0_i32, %c0_i32_0 : i32, i32
  }
  func.func @transform_6(%arg0: i32) -> (i32, i32) {
    %c0_i32 = arith.constant 0 : i32
    %c0_i32_0 = arith.constant 0 : i32
    return %arg0, %c0_i32 : i32, i32
  }
}

</mosaic_0001>

<llo_original>
// kernel: tpu_custom_call.1
$region0: #{tpu_custom_call.1}
  #allocation0 [shape = 'u32[]', space=smem, size = 0x4, offset = 0x4, fixed_abs, tag = 'smem constant byte address 0x4 - core index']
  #allocation1 [shape = 'u32[144,128]{1,0:T(1,128)}', space=vmem, size = 0x12000, scoped, tag = 'internal scratch']
  %s0 = inlined_call_operand.vmem [shape: f32[32,128], index: 0, kind: input, shape index: {}]
  %s1 = inlined_call_operand.vmem [shape: f32[32,1], index: 1, kind: input, shape index: {}]
  %s2 = inlined_call_operand.hbm [shape: bf16[384,128], index: 2, kind: input, shape index: {}]
  %s3 = inlined_call_operand.vmem [shape: f32[1,128], index: 3, kind: input, shape index: {}]
  %s4 = inlined_call_operand.hbm [shape: bf16[384,128], index: 4, kind: input, shape index: {}]
  %s5 = inlined_call_operand.vmem [shape: f32[1,128], index: 5, kind: input, shape index: {}]
  %s6 = inlined_call_operand.hbm [shape: f32[32,128], index: 6, kind: output, shape index: {}]
  %s7 = sld [smem:[#allocation0]]
  $region65: #{tpu_custom_call.1} parent=0
    _
  %s9 = ssub.s32 1, %s7
  %s10 = scalar_select 0, %s9, %s7
  $region1: #{tpu_custom_call.1} parent=0
    #allocation2 [shape = 'u8[98304]{0}', space=vmem, size = 0x18000, scoped, tag = 'input window, operand 2, single buffered']
    #allocation3 [shape = 's32[2]{0}', space=sflag, size = 0x8, scoped, tag = 'scoped memory for tpu_custom_call.1']
    #allocation4 [shape = 's32[2]{0}', space=sflag, size = 0x8, scoped, tag = 'scoped memory for tpu_custom_call.1']
    #allocation5 [shape = 'u8[98304]{0}', space=vmem, size = 0x18000, scoped, tag = 'input window, operand 4, single buffered']
    #allocation6 [shape = 's32[1]{0}', space=sflag, size = 0x4, scoped, tag = 'scoped memory for tpu_custom_call.1']
    #allocation7 [shape = 'u8[16384]{0}', space=vmem, size = 0x4000, scoped, tag = 'output window, operand 0']
    %11 = vsyncpa [#allocation3], 0
    %12 = vsyncpa [#allocation6], 0
    %13 = vsyncpa [#allocation4], 0
    %s14 = scalar_lea.sflag [#allocation4], 1
    %15 = vsyncpa %s14, 0
    loop: start=0, step=1, limit=4
    $region2: #{tpu_custom_call.1} parent=1 // loop_pre_header
      _
    $region3: #{tpu_custom_call.1} parent=1 // loop_header
      %s17 = sphi 0, %s21
      %p18 = scmp.ge.s32.totalorder %s17, 4
      %s27 = sphi 0, %s29
      %s30 = sphi 0, %s27
      %s31 = sphi 0, %s30
      %s47 = sphi 0, %s31
      %s53 = sphi 0, %s55
      %s56 = sphi 0, %s53
      %s57 = sphi 0, %s56
      %s73 = sphi 0, %s57
      %s77 = sphi 0, %s77
      %s79 = sphi 0, %s77
      %s80 = sphi 0, %s79
      %s94 = sphi 0, %s80
      %s98 = sphi 0, %s98
      %s100 = sphi 0, %s98
      %s101 = sphi 0, %s100
      %s115 = sphi 0, %s101
      %s119 = sphi 0, %s119
      %s121 = sphi 0, %s119
      %s122 = sphi 0, %s121
      %s136 = sphi 0, %s122
      %s140 = sphi 0, %s140
      %s142 = sphi 0, %s140
      %s143 = sphi 0, %s142
      %s157 = sphi 0, %s143
      %s163 = sphi 0, %s165
      %s166 = sphi 0, %s163
      %s167 = sphi 0, %s166
      %s183 = sphi 0, %s167
    $region4: #{tpu_custom_call.1} parent=1 // loop_header_branch
      %20 = sbr.rel (%p18) target = $region8
    $region5: #{tpu_custom_call.1} parent=1 // loop_body
      %s22 = ssub.s32 %s17, 1
      %s23 = ssub.s32 %s17, 2
      %s24 = sadd.s32 %s17, 1
      %s25 = ssub.s32 %s17, %s24
      %p26 = scmp.eq.s32.totalorder %s25, 0
      %s28 = sadd.s32 %s27, 1
      %s29 = scalar_select %p26, %s27, %s28
      %p32 = pneg %p26
      %p33 = scmp.eq.s32.totalorder %s17, 1
      %p34 = por %p32, %p33
      %p35 = scmp.ne.s32.totalorder %s27, %s30
      %p36 = scmp.eq.s32.totalorder %s17, 0
      %p37 = por %p35, %p36
      %p38 = scmp.ne.s32.totalorder %s27, %s30
      %p39 = scmp.eq.s32.totalorder %s22, 1
      %p40 = por %p38, %p39
      %p41 = scmp.ne.s32.totalorder %s30, %s31
      %p42 = scmp.eq.s32.totalorder %s22, 0
      %p43 = por %p41, %p42
      %p44 = scmp.ne.s32.totalorder %s30, %s31
      %p45 = scmp.eq.s32.totalorder %s23, 1
      %p46 = por %p44, %p45
      %p48 = scmp.ne.s32.totalorder %s31, %s47
      %p49 = scmp.eq.s32.totalorder %s23, 0
      %p50 = por %p48, %p49
      %s51 = ssub.s32 %s17, %s24
      %p52 = scmp.eq.s32.totalorder %s51, 0
      %s54 = sadd.s32 %s53, 1
      %s55 = scalar_select %p52, %s53, %s54
      %p58 = pneg %p52
      %p59 = scmp.eq.s32.totalorder %s17, 1
      %p60 = por %p58, %p59
      %p61 = scmp.ne.s32.totalorder %s53, %s56
      %p62 = scmp.eq.s32.totalorder %s17, 0
      %p63 = por %p61, %p62
      %p64 = scmp.ne.s32.totalorder %s53, %s56
      %p65 = scmp.eq.s32.totalorder %s22, 1
      %p66 = por %p64, %p65
      %p67 = scmp.ne.s32.totalorder %s56, %s57
      %p68 = scmp.eq.s32.totalorder %s22, 0
      %p69 = por %p67, %p68
      %p70 = scmp.ne.s32.totalorder %s56, %s57
      %p71 = scmp.eq.s32.totalorder %s23, 1
      %p72 = por %p70, %p71
      %p74 = scmp.ne.s32.totalorder %s57, %s73
      %p75 = scmp.eq.s32.totalorder %s23, 0
      %p76 = por %p74, %p75
      %s78 = sadd.s32 %s77, 1
      %p81 = scmp.eq.s32.totalorder %s17, 1
      %p82 = scmp.ne.s32.totalorder %s77, %s79
      %p83 = scmp.eq.s32.totalorder %s17, 0
      %p84 = por %p82, %p83
      %p85 = scmp.ne.s32.totalorder %s77, %s79
      %p86 = scmp.eq.s32.totalorder %s22, 1
      %p87 = por %p85, %p86
      %p88 = scmp.ne.s32.totalorder %s79, %s80
      %p89 = scmp.eq.s32.totalorder %s22, 0
      %p90 = por %p88, %p89
      %p91 = scmp.ne.s32.totalorder %s79, %s80
      %p92 = scmp.eq.s32.totalorder %s23, 1
      %p93 = por %p91, %p92
      %p95 = scmp.ne.s32.totalorder %s80, %s94
      %p96 = scmp.eq.s32.totalorder %s23, 0
      %p97 = por %p95, %p96
      %s99 = sadd.s32 %s98, 1
      %p102 = scmp.eq.s32.totalorder %s17, 1
      %p103 = scmp.ne.s32.totalorder %s98, %s100
      %p104 = scmp.eq.s32.totalorder %s17, 0
      %p105 = por %p103, %p104
      %p106 = scmp.ne.s32.totalorder %s98, %s100
      %p107 = scmp.eq.s32.totalorder %s22, 1
      %p108 = por %p106, %p107
      %p109 = scmp.ne.s32.totalorder %s100, %s101
      %p110 = scmp.eq.s32.totalorder %s22, 0
      %p111 = por %p109, %p110
      %p112 = scmp.ne.s32.totalorder %s100, %s101
      %p113 = scmp.eq.s32.totalorder %s23, 1
      %p114 = por %p112, %p113
      %p116 = scmp.ne.s32.totalorder %s101, %s115
      %p117 = scmp.eq.s32.totalorder %s23, 0
      %p118 = por %p116, %p117
      %s120 = sadd.s32 %s119, 1
      %p123 = scmp.eq.s32.totalorder %s17, 1
      %p124 = scmp.ne.s32.totalorder %s119, %s121
      %p125 = scmp.eq.s32.totalorder %s17, 0
      %p126 = por %p124, %p125
      %p127 = scmp.ne.s32.totalorder %s119, %s121
      %p128 = scmp.eq.s32.totalorder %s22, 1
      %p129 = por %p127, %p128
      %p130 = scmp.ne.s32.totalorder %s121, %s122
      %p131 = scmp.eq.s32.totalorder %s22, 0
      %p132 = por %p130, %p131
      %p133 = scmp.ne.s32.totalorder %s121, %s122
      %p134 = scmp.eq.s32.totalorder %s23, 1
      %p135 = por %p133, %p134
      %p137 = scmp.ne.s32.totalorder %s122, %s136
      %p138 = scmp.eq.s32.totalorder %s23, 0
      %p139 = por %p137, %p138
      %s141 = sadd.s32 %s140, 1
      %p144 = scmp.eq.s32.totalorder %s17, 1
      %p145 = scmp.ne.s32.totalorder %s140, %s142
      %p146 = scmp.eq.s32.totalorder %s17, 0
      %p147 = por %p145, %p146
      %p148 = scmp.ne.s32.totalorder %s140, %s142
      %p149 = scmp.eq.s32.totalorder %s22, 1
      %p150 = por %p148, %p149
      %p151 = scmp.ne.s32.totalorder %s142, %s143
      %p152 = scmp.eq.s32.totalorder %s22, 0
      %p153 = por %p151, %p152
      %p154 = scmp.ne.s32.totalorder %s142, %s143
      %p155 = scmp.eq.s32.totalorder %s23, 1
      %p156 = por %p154, %p155
      %p158 = scmp.ne.s32.totalorder %s143, %s157
      %p159 = scmp.eq.s32.totalorder %s23, 0
      %p160 = por %p158, %p159
      %s161 = ssub.s32 %s17, %s24
      %p162 = scmp.eq.s32.totalorder %s161, 0
      %s164 = sadd.s32 %s163, 1
      %s165 = scalar_select %p162, %s163, %s164
      %p168 = pneg %p162
      %p169 = scmp.eq.s32.totalorder %s17, 1
      %p170 = por %p168, %p169
      %p171 = scmp.ne.s32.totalorder %s163, %s166
      %p172 = scmp.eq.s32.totalorder %s17, 0
      %p173 = por %p171, %p172
      %p174 = scmp.ne.s32.totalorder %s163, %s166
      %p175 = scmp.eq.s32.totalorder %s22, 1
      %p176 = por %p174, %p175
      %p177 = scmp.ne.s32.totalorder %s166, %s167
      %p178 = scmp.eq.s32.totalorder %s22, 0
      %p179 = por %p177, %p178
      %p180 = scmp.ne.s32.totalorder %s166, %s167
      %p181 = scmp.eq.s32.totalorder %s23, 1
      %p182 = por %p180, %p181
      %p184 = scmp.ne.s32.totalorder %s167, %s183
      %p185 = scmp.eq.s32.totalorder %s23, 0
      %p186 = por %p184, %p185
      %p187 = scmp.le.s32.totalorder 1, %s17
      %p188 = scmp.lt.s32.totalorder %s17, 3
      %p189 = pnand %p187, %p188
      %p190 = pneg %p189
      // Predicated region
      $region9: #{tpu_custom_call.1} parent=5 // pred_check
        _
      $region10: #{tpu_custom_call.1} parent=5 // pred_check_branch
        %192 = sbr.rel (%p189) target = $region12
      $region11: #{tpu_custom_call.1} parent=5 // pred_region
        %s193 = ssub.s32 %s17, 1
        // Predicated region
        $region13: #{tpu_custom_call.1} parent=11 // pred_check
          %p194 = pneg %p90
        $region14: #{tpu_custom_call.1} parent=11 // pred_check_branch
          %196 = sbr.rel (%p194) target = $region16
        $region15: #{tpu_custom_call.1} parent=11 // pred_region
          %s198 = ssub.s32 3072, 3072
          %199 = vsyncadd [#allocation3], %s198
          %s200 = sshll.u32 [#allocation2], 4
          %s201 = int_to_ptr.vmem [resolvable:$true] %s200
          %206 = dma.hbm_to_vmem [thread:$0]  %s2, 3072, %s201, [#allocation3], 64, 64, 4
        $region16: #{tpu_custom_call.1} parent=11 // pred_fallthru
          _
        // Predicated region
        $region17: #{tpu_custom_call.1} parent=11 // pred_check
          %p207 = pneg %p111
        $region18: #{tpu_custom_call.1} parent=11 // pred_check_branch
          %209 = sbr.rel (%p207) target = $region20
        $region19: #{tpu_custom_call.1} parent=11 // pred_region
          _
        $region20: #{tpu_custom_call.1} parent=11 // pred_fallthru
          _
        // Predicated region
        $region21: #{tpu_custom_call.1} parent=11 // pred_check
          %p210 = pneg %p132
        $region22: #{tpu_custom_call.1} parent=11 // pred_check_branch
          %212 = sbr.rel (%p210) target = $region24
        $region23: #{tpu_custom_call.1} parent=11 // pred_region
          %s214 = ssub.s32 3072, 3072
          %215 = vsyncadd [#allocation6], %s214
          %s216 = sshll.u32 [#allocation5], 4
          %s217 = int_to_ptr.vmem [resolvable:$true] %s216
          %222 = dma.hbm_to_vmem [thread:$0]  %s4, 3072, %s217, [#allocation6], 64, 64, 4
        $region24: #{tpu_custom_call.1} parent=11 // pred_fallthru
          _
        // Predicated region
        $region25: #{tpu_custom_call.1} parent=11 // pred_check
          %p223 = pneg %p153
        $region26: #{tpu_custom_call.1} parent=11 // pred_check_branch
          %225 = sbr.rel (%p223) target = $region28
        $region27: #{tpu_custom_call.1} parent=11 // pred_region
          _
        $region28: #{tpu_custom_call.1} parent=11 // pred_fallthru
          _
      $region12: #{tpu_custom_call.1} parent=5 // pred_fallthru
        _
      %p226 = scmp.lt.s32.totalorder %s17, 2
      // Predicated region
      $region29: #{tpu_custom_call.1} parent=5 // pred_check
        %p227 = pneg %p226
      $region30: #{tpu_custom_call.1} parent=5 // pred_check_branch
        %229 = sbr.rel (%p227) target = $region32
      $region31: #{tpu_custom_call.1} parent=5 // pred_region
        // Predicated region
        $region33: #{tpu_custom_call.1} parent=31 // pred_check
          %p230 = pneg %p37
        $region34: #{tpu_custom_call.1} parent=31 // pred_check_branch
          %232 = sbr.rel (%p230) target = $region36
        $region35: #{tpu_custom_call.1} parent=31 // pred_region
          %s233 = smul.u32 2, %s17
          %p234 = scmp.lt.s32.totalorder %s233, 3
          %s235 = scalar_select %p234, %s233, 3
          %s236 = smul.addr %s235, 8
          %s237 = scalar_lea.vmem %s0, %s236
          %s238 = smul.u32 2, %s17
        $region36: #{tpu_custom_call.1} parent=31 // pred_fallthru
          _
        // Predicated region
        $region37: #{tpu_custom_call.1} parent=31 // pred_check
          %p239 = pneg %p63
        $region38: #{tpu_custom_call.1} parent=31 // pred_check_branch
          %241 = sbr.rel (%p239) target = $region40
        $region39: #{tpu_custom_call.1} parent=31 // pred_region
          %s242 = smul.u32 2, %s17
          %p243 = scmp.lt.s32.totalorder %s242, 3
          %s244 = scalar_select %p243, %s242, 3
          %s245 = smul.addr %s244, 8
          %s246 = scalar_lea.vmem %s1, %s245
          %s247 = smul.u32 2, %s17
        $region40: #{tpu_custom_call.1} parent=31 // pred_fallthru
          _
      $region32: #{tpu_custom_call.1} parent=5 // pred_fallthru
        _
      %p248 = scmp.le.s32.totalorder 1, %s17
      %p249 = scmp.lt.s32.totalorder %s17, 3
      %p250 = pnand %p248, %p249
      %p251 = pneg %p250
      // Predicated region
      $region41: #{tpu_custom_call.1} parent=5 // pred_check
        _
      $region42: #{tpu_custom_call.1} parent=5 // pred_check_branch
        %253 = sbr.rel (%p250) target = $region44
      $region43: #{tpu_custom_call.1} parent=5 // pred_region
        %s254 = ssub.s32 %s17, 1
        // Predicated region
        $region45: #{tpu_custom_call.1} parent=43 // pred_check
          %p255 = pneg %p90
        $region46: #{tpu_custom_call.1} parent=43 // pred_check_branch
          %257 = sbr.rel (%p255) target = $region48
        $region47: #{tpu_custom_call.1} parent=43 // pred_region
          %258 = dma.done [#allocation3], 3072
        $region48: #{tpu_custom_call.1} parent=43 // pred_fallthru
          _
        // Predicated region
        $region49: #{tpu_custom_call.1} parent=43 // pred_check
          %p259 = pneg %p132
        $region50: #{tpu_custom_call.1} parent=43 // pred_check_branch
          %261 = sbr.rel (%p259) target = $region52
        $region51: #{tpu_custom_call.1} parent=43 // pred_region
          %262 = dma.done [#allocation6], 3072
        $region52: #{tpu_custom_call.1} parent=43 // pred_fallthru
          _
        %s263 = smul.u32 2, %s22
        %p264 = scmp.lt.s32.totalorder %s263, 3
        %s265 = scalar_select %p264, %s263, 3
        %s266 = smul.addr %s265, 8
        %s267 = scalar_lea.vmem %s0, %s266
        %p268 = pneg %p43
        %p269 = pneg %p40
        %s270 = smul.u32 2, %s22
        %p271 = scmp.lt.s32.totalorder %s270, 3
        %s272 = scalar_select %p271, %s270, 3
        %s273 = smul.addr %s272, 8
        %s274 = scalar_lea.vmem %s1, %s273
        %p275 = pneg %p69
        %p276 = pneg %p66
        %p277 = pneg %p90
        %p278 = pneg %p87
        %p279 = pneg %p111
        %p280 = pneg %p108
        %p281 = pneg %p132
        %p282 = pneg %p129
        %p283 = pneg %p153
        %p284 = pneg %p150
        %p285 = pneg %p179
        %p286 = pneg %p176
        %s287 = sand.u32 %s166, 1
        %s288 = scalar_lea.sflag [#allocation4], %s287
        %s289 = sand.u32 %s166, 1
        %s290 = smul.addr %s289, 16
        %s291 = scalar_lea.vmem [#allocation7], %s290
        %s292 = smul.u32 2, %s22
        %p293 = scmp.lt.s32.totalorder %s292, 3
        %s294 = scalar_select %p293, %s292, 3
        %s295 = smul.addr %s294, 8
        %s296 = scalar_lea.vmem %s0, %s295
        %s297 = smul.u32 2, %s22
        %s298 = smul.u32 2, %s22
        %p299 = scmp.lt.s32.totalorder %s298, 3
        %s300 = scalar_select %p299, %s298, 3
        %s301 = smul.addr %s300, 8
        %s302 = scalar_lea.vmem %s1, %s301
        %s303 = smul.u32 2, %s22
        %s304 = smul.u32 2, %s22
        %v306 = vld [vmem:[%s302] sm:$0xff]
        %v307 = vld [vmem:[%s302 + $0x8] sm:$0xff]
        %v308 = vld [vmem:[%s296] sm:$0xff]
        %v309 = vld [vmem:[%s296 + $0x8] sm:$0xff]
        %311 = vset.pattern.permute.xlu0 0
        %312 = vperm.xlu0 %311, %v306
        %v313 = vpop.permute.xlu0 %312
        %316 = vset.pattern.permute.xlu0 0
        %317 = vperm.xlu0 %316, %v307
        %v318 = vpop.permute.xlu0 %317
        %v320 = vmul.f32 %v308, %v313
        %v321 = vmul.f32 %v309, %v318
        %v322 = vlaneseq
        %v323 = vshrl.u32 %v322, 7
        %v324 = vadd.s32 %v323, 8
        %vm325 = vcmp.lt.s32.totalorder %v323, 0
        %v326 = vsub.s32 0, %v323
        %v327 = vsel %vm325, %v326, %v323
        %v328 = vshrl.u32 %v327, 4
        %v329 = vand.u32 %v327, 15
        %v330 = vsub.s32 0, %v329
        %v331 = vsel %vm325, %v330, %v329
        %vm332 = vcmp.lt.s32.totalorder %v324, 0
        %v333 = vsub.s32 0, %v324
        %v334 = vsel %vm332, %v333, %v324
        %v335 = vshrl.u32 %v334, 4
        %v336 = vand.u32 %v334, 15
        %v337 = vsub.s32 0, %v336
        %v338 = vsel %vm332, %v337, %v336
        %vm339 = vcmp.ne.s32.totalorder %v331, 0
        %vm340 = vcmp.ne.s32.totalorder %v338, 0
        %vm341 = vcmp.lt.s32.totalorder %v331, 0
        %vm342 = vcmp.lt.s32.totalorder %v338, 0
        %vm343 = vmand %vm341, %vm339
        %vm344 = vmand %vm342, %vm340
        %v345 = vadd.s32 %v331, 16
        %v346 = vadd.s32 %v338, 16
        %v347 = vsel %vm343, %v345, %v331
        %v348 = vsel %vm344, %v346, %v338
        %v349 = vadd.s32 %v347, 4294967295
        %v350 = vadd.s32 %v348, 4294967295
        %vm351 = vcmp.ge.s32.totalorder %v349, 0
        %vm352 = vcmp.ge.s32.totalorder %v350, 0
        %vm353 = vcmp.lt.s32.totalorder %v349, 16
        %vm354 = vcmp.lt.s32.totalorder %v350, 16
        %vm355 = vmand %vm351, %vm353
        %vm356 = vmand %vm352, %vm354
        %v357 = vadd.s32 %v347, 1
        %v358 = vadd.s32 %v348, 1
        %vm359 = vcmp.ge.s32.totalorder %v357, 0
        %vm360 = vcmp.ge.s32.totalorder %v358, 0
        %vm361 = vcmp.lt.s32.totalorder %v357, 16
        %vm362 = vcmp.lt.s32.totalorder %v358, 16
        %vm363 = vmand %vm359, %vm361
        %vm364 = vmand %vm360, %vm362
        %v365 = vrot.slane %v320, 7
        %v366 = vrot.slane %v321, 7
        %vm367 = vcmp.lt.s32.totalorder %v323, 1
        %v368 = vsel %vm367, %v365, %v366
        %v369 = vsel %vm367, %v366, %v365
        %v370 = vsel %vm355, 1, 0
        %v371 = vsel %vm356, 1, 0
        %vm372 = vcmp.eq.s32.totalorder %v370, 1
        %vm373 = vcmp.eq.s32.totalorder %v371, 1
        %v374 = vsel %vm372, %v369, 0.0
        %v375 = vsel %vm373, %v368, 0.0
        %v376 = vrot.slane %v320, 1
        %v377 = vrot.slane %v321, 1
        %vm378 = vcmp.lt.s32.totalorder %v323, 7
        %v379 = vsel %vm378, %v376, %v377
        %v380 = vsel %vm378, %v377, %v376
        %v381 = vsel %vm363, 1, 0
        %v382 = vsel %vm364, 1, 0
        %vm383 = vcmp.eq.s32.totalorder %v381, 1
        %vm384 = vcmp.eq.s32.totalorder %v382, 1
        %v385 = vsel %vm383, %v379, 0.0
        %v386 = vsel %vm384, %v380, 0.0
        %v387 = vpack.c.bf16 %v375, %v374
        %v388 = vpack.c.bf16 %v321, %v320
        %v389 = vpack.c.bf16 %v386, %v385
        %v390 = vld [vmem:[#allocation2] sm:$0xf]
        %v391 = vld [vmem:[#allocation2 + $0x4] sm:$0xf]
        %v392 = vld [vmem:[#allocation2 + $0x8] sm:$0xf]
        %v393 = vld [vmem:[#allocation2 + $0xc] sm:$0xf]
        %v394 = vld [vmem:[#allocation2 + $0x10] sm:$0xf]
        %v395 = vld [vmem:[#allocation2 + $0x14] sm:$0xf]
        %v396 = vld [vmem:[#allocation2 + $0x18] sm:$0xf]
        %v397 = vld [vmem:[#allocation2 + $0x1c] sm:$0xf]
        %v398 = vld [vmem:[#allocation2 + $0x20] sm:$0xf]
        %v399 = vld [vmem:[#allocation2 + $0x24] sm:$0xf]
        %v400 = vld [vmem:[#allocation2 + $0x28] sm:$0xf]
        %v401 = vld [vmem:[#allocation2 + $0x2c] sm:$0xf]
        %v402 = vld [vmem:[#allocation2 + $0x30] sm:$0xf]
        %v403 = vld [vmem:[#allocation2 + $0x34] sm:$0xf]
        %v404 = vld [vmem:[#allocation2 + $0x38] sm:$0xf]
        %v405 = vld [vmem:[#allocation2 + $0x3c] sm:$0xf]
        %v406 = vld [vmem:[#allocation2 + $0x40] sm:$0xf]
        %v407 = vld [vmem:[#allocation2 + $0x44] sm:$0xf]
        %v408 = vld [vmem:[#allocation2 + $0x48] sm:$0xf]
        %v409 = vld [vmem:[#allocation2 + $0x4c] sm:$0xf]
        %v410 = vld [vmem:[#allocation2 + $0x50] sm:$0xf]
        %v411 = vld [vmem:[#allocation2 + $0x54] sm:$0xf]
        %v412 = vld [vmem:[#allocation2 + $0x58] sm:$0xf]
        %v413 = vld [vmem:[#allocation2 + $0x5c] sm:$0xf]
        %v414 = vld [vmem:[#allocation2 + $0x60] sm:$0xf]
        %v415 = vld [vmem:[#allocation2 + $0x64] sm:$0xf]
        %v416 = vld [vmem:[#allocation2 + $0x68] sm:$0xf]
        %v417 = vld [vmem:[#allocation2 + $0x6c] sm:$0xf]
        %v418 = vld [vmem:[#allocation2 + $0x70] sm:$0xf]
        %v419 = vld [vmem:[#allocation2 + $0x74] sm:$0xf]
        %v420 = vld [vmem:[#allocation2 + $0x78] sm:$0xf]
        %v421 = vld [vmem:[#allocation2 + $0x7c] sm:$0xf]
        %v422 = vld [vmem:[#allocation2 + $0x80] sm:$0xf]
        %v423 = vld [vmem:[#allocation2 + $0x84] sm:$0xf]
        %v424 = vld [vmem:[#allocation2 + $0x88] sm:$0xf]
        %v425 = vld [vmem:[#allocation2 + $0x8c] sm:$0xf]
        %v426 = vld [vmem:[#allocation2 + $0x90] sm:$0xf]
        %v427 = vld [vmem:[#allocation2 + $0x94] sm:$0xf]
        %v428 = vld [vmem:[#allocation2 + $0x98] sm:$0xf]
        %v429 = vld [vmem:[#allocation2 + $0x9c] sm:$0xf]
        %v430 = vld [vmem:[#allocation2 + $0xa0] sm:$0xf]
        %v431 = vld [vmem:[#allocation2 + $0xa4] sm:$0xf]
        %v432 = vld [vmem:[#allocation2 + $0xa8] sm:$0xf]
        %v433 = vld [vmem:[#allocation2 + $0xac] sm:$0xf]
        %v434 = vld [vmem:[#allocation2 + $0xb0] sm:$0xf]
        %v435 = vld [vmem:[#allocation2 + $0xb4] sm:$0xf]
        %v436 = vld [vmem:[#allocation2 + $0xb8] sm:$0xf]
        %v437 = vld [vmem:[#allocation2 + $0xbc] sm:$0xf]
        %v438 = vld [vmem:[%s3] sm:$0x1]
        %v440 = vlaneseq
        %v441 = vshrl.u32 %v440, 7
        %v442 = vsub.s32 0, %v441
        %v443 = vrot.slane %v438, %v442
        %v493 = vunpack.c.l.b16 %v390
        %v494 = vunpack.c.l.b16 %v391
        %v495 = vunpack.c.l.b16 %v392
        %v496 = vunpack.c.l.b16 %v393
        %v497 = vunpack.c.l.b16 %v394
        %v498 = vunpack.c.l.b16 %v395
        %v499 = vunpack.c.l.b16 %v396
        %v500 = vunpack.c.l.b16 %v397
        %v501 = vunpack.c.l.b16 %v398
        %v502 = vunpack.c.l.b16 %v399
        %v503 = vunpack.c.l.b16 %v400
        %v504 = vunpack.c.l.b16 %v401
        %v505 = vunpack.c.l.b16 %v402
        %v506 = vunpack.c.l.b16 %v403
        %v507 = vunpack.c.l.b16 %v404
        %v508 = vunpack.c.l.b16 %v405
        %v509 = vunpack.c.l.b16 %v406
        %v510 = vunpack.c.l.b16 %v407
        %v511 = vunpack.c.l.b16 %v408
        %v512 = vunpack.c.l.b16 %v409
        %v513 = vunpack.c.l.b16 %v410
        %v514 = vunpack.c.l.b16 %v411
        %v515 = vunpack.c.l.b16 %v412
        %v516 = vunpack.c.l.b16 %v413
        %v517 = vunpack.c.l.b16 %v414
        %v518 = vunpack.c.l.b16 %v415
        %v519 = vunpack.c.l.b16 %v416
        %v520 = vunpack.c.l.b16 %v417
        %v521 = vunpack.c.l.b16 %v418
        %v522 = vunpack.c.l.b16 %v419
        %v523 = vunpack.c.l.b16 %v420
        %v524 = vunpack.c.l.b16 %v421
        %v525 = vunpack.c.l.b16 %v422
        %v526 = vunpack.c.l.b16 %v423
        %v527 = vunpack.c.l.b16 %v424
        %v528 = vunpack.c.l.b16 %v425
        %v529 = vunpack.c.l.b16 %v426
        %v530 = vunpack.c.l.b16 %v427
        %v531 = vunpack.c.l.b16 %v428
        %v532 = vunpack.c.l.b16 %v429
        %v533 = vunpack.c.l.b16 %v430
        %v534 = vunpack.c.l.b16 %v431
        %v535 = vunpack.c.l.b16 %v432
        %v536 = vunpack.c.l.b16 %v433
        %v537 = vunpack.c.l.b16 %v434
        %v538 = vunpack.c.l.b16 %v435
        %v539 = vunpack.c.l.b16 %v436
        %v540 = vunpack.c.l.b16 %v437
        %v541 = vpack.c.b16 %v494, %v493
        %v542 = vpack.c.b16 %v496, %v495
        %v543 = vpack.c.b16 %v498, %v497
        %v544 = vpack.c.b16 %v500, %v499
        %v545 = vpack.c.b16 %v502, %v501
        %v546 = vpack.c.b16 %v504, %v503
        %v547 = vpack.c.b16 %v506, %v505
        %v548 = vpack.c.b16 %v508, %v507
        %v549 = vpack.c.b16 %v510, %v509
        %v550 = vpack.c.b16 %v512, %v511
        %v551 = vpack.c.b16 %v514, %v513
        %v552 = vpack.c.b16 %v516, %v515
        %v553 = vpack.c.b16 %v518, %v517
        %v554 = vpack.c.b16 %v520, %v519
        %v555 = vpack.c.b16 %v522, %v521
        %v556 = vpack.c.b16 %v524, %v523
        %v557 = vpack.c.b16 %v526, %v525
        %v558 = vpack.c.b16 %v528, %v527
        %v559 = vpack.c.b16 %v530, %v529
        %v560 = vpack.c.b16 %v532, %v531
        %v561 = vpack.c.b16 %v534, %v533
        %v562 = vpack.c.b16 %v536, %v535
        %v563 = vpack.c.b16 %v538, %v537
        %v564 = vpack.c.b16 %v540, %v539
        %589 = vmatprep.subr.bf16.mxu0 0
        %590 = vmatpush1.bf16.msra.mxu0 %v548
        %591 = vmatprep.subr.bf16.mxu0 0
        %592 = vmatpush1.bf16.msra.mxu0 %v547
        %593 = vmatprep.subr.bf16.mxu0 0
        %594 = vmatpush1.bf16.msra.mxu0 %v546
        %595 = vmatprep.subr.bf16.mxu0 0
        %596 = vmatpush1.bf16.msra.mxu0 %v545
        %597 = vmatprep.subr.bf16.mxu0 0
        %598 = vmatpush1.bf16.msra.mxu0 %v544
        %599 = vmatprep.subr.bf16.mxu0 0
        %600 = vmatpush1.bf16.msra.mxu0 %v543
        %601 = vmatprep.subr.bf16.mxu0 0
        %602 = vmatpush1.bf16.msra.mxu0 %v542
        %603 = vmatprep.subr.bf16.mxu0 0
        %604 = vmatpush1.bf16.msra.mxu0 %v541
        %605 = vmatprep.subr.bf16.mxu0 0
        %606 = vmatpush2.bf16.msra.mxu0 %v556
        %607 = vmatprep.subr.bf16.mxu0 0
        %608 = vmatpush2.bf16.msra.mxu0 %v555
        %609 = vmatprep.subr.bf16.mxu0 0
        %610 = vmatpush2.bf16.msra.mxu0 %v554
        %611 = vmatprep.subr.bf16.mxu0 0
        %612 = vmatpush2.bf16.msra.mxu0 %v553
        %613 = vmatprep.subr.bf16.mxu0 0
        %614 = vmatpush2.bf16.msra.mxu0 %v552
        %615 = vmatprep.subr.bf16.mxu0 0
        %616 = vmatpush2.bf16.msra.mxu0 %v551
        %617 = vmatprep.subr.bf16.mxu0 0
        %618 = vmatpush2.bf16.msra.mxu0 %v550
        %619 = vmatprep.subr.bf16.mxu0 0
        %620 = vmatpush2.bf16.msra.mxu0 %v549
        %621 = vmatprep.mubr.bf16.mxu0 %v388
        %622 = vmatmul.mubr.bf16.gmra.mxu0 %v387
        %v623 = vpop.f32.mrf.mxu0
        %v624 = vadd.f32 %v443, %v623
        %v625 = vpop.f32.mrf.mxu0
        %v626 = vpop.f32.mrf.mxu0
        %v627 = vadd.f32 %v443, %v626
        %v628 = vpop.f32.mrf.mxu0
        %629 = vdwg.mxu0
        %630 = vmatprep.subr.bf16.mxu0 0
        %631 = vmatpush1.bf16.msra.mxu0 %v564
        %632 = vmatprep.subr.bf16.mxu0 0
        %633 = vmatpush1.bf16.msra.mxu0 %v563
        %634 = vmatprep.subr.bf16.mxu0 0
        %635 = vmatpush1.bf16.msra.mxu0 %v562
        %636 = vmatprep.subr.bf16.mxu0 0
        %637 = vmatpush1.bf16.msra.mxu0 %v561
        %638 = vmatprep.subr.bf16.mxu0 0
        %639 = vmatpush1.bf16.msra.mxu0 %v560
        %640 = vmatprep.subr.bf16.mxu0 0
        %641 = vmatpush1.bf16.msra.mxu0 %v559
        %642 = vmatprep.subr.bf16.mxu0 0
        %643 = vmatpush1.bf16.msra.mxu0 %v558
        %644 = vmatprep.subr.bf16.mxu0 0
        %645 = vmatpush1.bf16.msra.mxu0 %v557
        %646 = vmatprep.subr.bf16.mxu0 0
        %647 = vmatpush2.bf16.msra.mxu0 0
        %648 = vmatprep.subr.bf16.mxu0 0
        %649 = vmatpush2.bf16.msra.mxu0 0
        %650 = vmatprep.subr.bf16.mxu0 0
        %651 = vmatpush2.bf16.msra.mxu0 0
        %652 = vmatprep.subr.bf16.mxu0 0
        %653 = vmatpush2.bf16.msra.mxu0 0
        %654 = vmatprep.subr.bf16.mxu0 0
        %655 = vmatpush2.bf16.msra.mxu0 0
        %656 = vmatprep.subr.bf16.mxu0 0
        %657 = vmatpush2.bf16.msra.mxu0 0
        %658 = vmatprep.subr.bf16.mxu0 0
        %659 = vmatpush2.bf16.msra.mxu0 0
        %660 = vmatprep.subr.bf16.mxu0 0
        %661 = vmatpush2.bf16.msra.mxu0 0
        %662 = vmatprep.mubr.bf16.mxu0 0
        %663 = vmatmul.mubr.bf16.gmra.mxu0 %v389
        %v664 = vpop.f32.mrf.mxu0
        %v665 = vadd.f32 %v624, %v664
        %v666 = vpop.f32.mrf.mxu0
        %v667 = vpop.f32.mrf.mxu0
        %v668 = vadd.f32 %v627, %v667
        %v669 = vpop.f32.mrf.mxu0
        %670 = vdwg.mxu0
        %v671 = vmax.f32 %v665, 0.0
        %v672 = vmax.f32 %v668, 0.0
        %v673 = vmul.f32 %v671, %v313
        %v674 = vmul.f32 %v672, %v318
        %v675 = vrot.slane %v673, 7
        %v676 = vrot.slane %v674, 7
        %v677 = vsel %vm367, %v675, %v676
        %v678 = vsel %vm367, %v676, %v675
        %v679 = vsel %vm372, %v678, 0.0
        %v680 = vsel %vm373, %v677, 0.0
        %v681 = vrot.slane %v673, 1
        %v682 = vrot.slane %v674, 1
        %v683 = vsel %vm378, %v681, %v682
        %v684 = vsel %vm378, %v682, %v681
        %v685 = vsel %vm383, %v683, 0.0
        %v686 = vsel %vm384, %v684, 0.0
        %v687 = vpack.c.bf16 %v680, %v679
        %v688 = vpack.c.bf16 %v674, %v673
        %v689 = vpack.c.bf16 %v686, %v685
        %v690 = vld [vmem:[#allocation5] sm:$0xf]
        %v691 = vld [vmem:[#allocation5 + $0x4] sm:$0xf]
        %v692 = vld [vmem:[#allocation5 + $0x8] sm:$0xf]
        %v693 = vld [vmem:[#allocation5 + $0xc] sm:$0xf]
        %v694 = vld [vmem:[#allocation5 + $0x10] sm:$0xf]
        %v695 = vld [vmem:[#allocation5 + $0x14] sm:$0xf]
        %v696 = vld [vmem:[#allocation5 + $0x18] sm:$0xf]
        %v697 = vld [vmem:[#allocation5 + $0x1c] sm:$0xf]
        %v698 = vld [vmem:[#allocation5 + $0x20] sm:$0xf]
        %v699 = vld [vmem:[#allocation5 + $0x24] sm:$0xf]
        %v700 = vld [vmem:[#allocation5 + $0x28] sm:$0xf]
        %v701 = vld [vmem:[#allocation5 + $0x2c] sm:$0xf]
        %v702 = vld [vmem:[#allocation5 + $0x30] sm:$0xf]
        %v703 = vld [vmem:[#allocation5 + $0x34] sm:$0xf]
        %v704 = vld [vmem:[#allocation5 + $0x38] sm:$0xf]
        %v705 = vld [vmem:[#allocation5 + $0x3c] sm:$0xf]
        %v706 = vld [vmem:[#allocation5 + $0x40] sm:$0xf]
        %v707 = vld [vmem:[#allocation5 + $0x44] sm:$0xf]
        %v708 = vld [vmem:[#allocation5 + $0x48] sm:$0xf]
        %v709 = vld [vmem:[#allocation5 + $0x4c] sm:$0xf]
        %v710 = vld [vmem:[#allocation5 + $0x50] sm:$0xf]
        %v711 = vld [vmem:[#allocation5 + $0x54] sm:$0xf]
        %v712 = vld [vmem:[#allocation5 + $0x58] sm:$0xf]
        %v713 = vld [vmem:[#allocation5 + $0x5c] sm:$0xf]
        %v714 = vld [vmem:[#allocation5 + $0x60] sm:$0xf]
        %v715 = vld [vmem:[#allocation5 + $0x64] sm:$0xf]
        %v716 = vld [vmem:[#allocation5 + $0x68] sm:$0xf]
        %v717 = vld [vmem:[#allocation5 + $0x6c] sm:$0xf]
        %v718 = vld [vmem:[#allocation5 + $0x70] sm:$0xf]
        %v719 = vld [vmem:[#allocation5 + $0x74] sm:$0xf]
        %v720 = vld [vmem:[#allocation5 + $0x78] sm:$0xf]
        %v721 = vld [vmem:[#allocation5 + $0x7c] sm:$0xf]
        %v722 = vld [vmem:[#allocation5 + $0x80] sm:$0xf]
        %v723 = vld [vmem:[#allocation5 + $0x84] sm:$0xf]
        %v724 = vld [vmem:[#allocation5 + $0x88] sm:$0xf]
        %v725 = vld [vmem:[#allocation5 + $0x8c] sm:$0xf]
        %v726 = vld [vmem:[#allocation5 + $0x90] sm:$0xf]
        %v727 = vld [vmem:[#allocation5 + $0x94] sm:$0xf]
        %v728 = vld [vmem:[#allocation5 + $0x98] sm:$0xf]
        %v729 = vld [vmem:[#allocation5 + $0x9c] sm:$0xf]
        %v730 = vld [vmem:[#allocation5 + $0xa0] sm:$0xf]
        %v731 = vld [vmem:[#allocation5 + $0xa4] sm:$0xf]
        %v732 = vld [vmem:[#allocation5 + $0xa8] sm:$0xf]
        %v733 = vld [vmem:[#allocation5 + $0xac] sm:$0xf]
        %v734 = vld [vmem:[#allocation5 + $0xb0] sm:$0xf]
        %v735 = vld [vmem:[#allocation5 + $0xb4] sm:$0xf]
        %v736 = vld [vmem:[#allocation5 + $0xb8] sm:$0xf]
        %v737 = vld [vmem:[#allocation5 + $0xbc] sm:$0xf]
        %v738 = vld [vmem:[%s5] sm:$0x1]
        %v740 = vlaneseq
        %v741 = vshrl.u32 %v740, 7
        %v742 = vsub.s32 0, %v741
        %v743 = vrot.slane %v738, %v742
        %v793 = vunpack.c.l.b16 %v690
        %v794 = vunpack.c.l.b16 %v691
        %v795 = vunpack.c.l.b16 %v692
        %v796 = vunpack.c.l.b16 %v693
        %v797 = vunpack.c.l.b16 %v694
        %v798 = vunpack.c.l.b16 %v695
        %v799 = vunpack.c.l.b16 %v696
        %v800 = vunpack.c.l.b16 %v697
        %v801 = vunpack.c.l.b16 %v698
        %v802 = vunpack.c.l.b16 %v699
        %v803 = vunpack.c.l.b16 %v700
        %v804 = vunpack.c.l.b16 %v701
        %v805 = vunpack.c.l.b16 %v702
        %v806 = vunpack.c.l.b16 %v703
        %v807 = vunpack.c.l.b16 %v704
        %v808 = vunpack.c.l.b16 %v705
        %v809 = vunpack.c.l.b16 %v706
        %v810 = vunpack.c.l.b16 %v707
        %v811 = vunpack.c.l.b16 %v708
        %v812 = vunpack.c.l.b16 %v709
        %v813 = vunpack.c.l.b16 %v710
        %v814 = vunpack.c.l.b16 %v711
        %v815 = vunpack.c.l.b16 %v712
        %v816 = vunpack.c.l.b16 %v713
        %v817 = vunpack.c.l.b16 %v714
        %v818 = vunpack.c.l.b16 %v715
        %v819 = vunpack.c.l.b16 %v716
        %v820 = vunpack.c.l.b16 %v717
        %v821 = vunpack.c.l.b16 %v718
        %v822 = vunpack.c.l.b16 %v719
        %v823 = vunpack.c.l.b16 %v720
        %v824 = vunpack.c.l.b16 %v721
        %v825 = vunpack.c.l.b16 %v722
        %v826 = vunpack.c.l.b16 %v723
        %v827 = vunpack.c.l.b16 %v724
        %v828 = vunpack.c.l.b16 %v725
        %v829 = vunpack.c.l.b16 %v726
        %v830 = vunpack.c.l.b16 %v727
        %v831 = vunpack.c.l.b16 %v728
        %v832 = vunpack.c.l.b16 %v729
        %v833 = vunpack.c.l.b16 %v730
        %v834 = vunpack.c.l.b16 %v731
        %v835 = vunpack.c.l.b16 %v732
        %v836 = vunpack.c.l.b16 %v733
        %v837 = vunpack.c.l.b16 %v734
        %v838 = vunpack.c.l.b16 %v735
        %v839 = vunpack.c.l.b16 %v736
        %v840 = vunpack.c.l.b16 %v737
        %v841 = vpack.c.b16 %v794, %v793
        %v842 = vpack.c.b16 %v796, %v795
        %v843 = vpack.c.b16 %v798, %v797
        %v844 = vpack.c.b16 %v800, %v799
        %v845 = vpack.c.b16 %v802, %v801
        %v846 = vpack.c.b16 %v804, %v803
        %v847 = vpack.c.b16 %v806, %v805
        %v848 = vpack.c.b16 %v808, %v807
        %v849 = vpack.c.b16 %v810, %v809
        %v850 = vpack.c.b16 %v812, %v811
        %v851 = vpack.c.b16 %v814, %v813
        %v852 = vpack.c.b16 %v816, %v815
        %v853 = vpack.c.b16 %v818, %v817
        %v854 = vpack.c.b16 %v820, %v819
        %v855 = vpack.c.b16 %v822, %v821
        %v856 = vpack.c.b16 %v824, %v823
        %v857 = vpack.c.b16 %v826, %v825
        %v858 = vpack.c.b16 %v828, %v827
        %v859 = vpack.c.b16 %v830, %v829
        %v860 = vpack.c.b16 %v832, %v831
        %v861 = vpack.c.b16 %v834, %v833
        %v862 = vpack.c.b16 %v836, %v835
        %v863 = vpack.c.b16 %v838, %v837
        %v864 = vpack.c.b16 %v840, %v839
        %889 = vmatprep.subr.bf16.mxu0 0
        %890 = vmatpush1.bf16.msra.mxu0 %v848
        %891 = vmatprep.subr.bf16.mxu0 0
        %892 = vmatpush1.bf16.msra.mxu0 %v847
        %893 = vmatprep.subr.bf16.mxu0 0
        %894 = vmatpush1.bf16.msra.mxu0 %v846
        %895 = vmatprep.subr.bf16.mxu0 0
        %896 = vmatpush1.bf16.msra.mxu0 %v845
        %897 = vmatprep.subr.bf16.mxu0 0
        %898 = vmatpush1.bf16.msra.mxu0 %v844
        %899 = vmatprep.subr.bf16.mxu0 0
        %900 = vmatpush1.bf16.msra.mxu0 %v843
        %901 = vmatprep.subr.bf16.mxu0 0
        %902 = vmatpush1.bf16.msra.mxu0 %v842
        %903 = vmatprep.subr.bf16.mxu0 0
        %904 = vmatpush1.bf16.msra.mxu0 %v841
        %905 = vmatprep.subr.bf16.mxu0 0
        %906 = vmatpush2.bf16.msra.mxu0 %v856
        %907 = vmatprep.subr.bf16.mxu0 0
        %908 = vmatpush2.bf16.msra.mxu0 %v855
        %909 = vmatprep.subr.bf16.mxu0 0
        %910 = vmatpush2.bf16.msra.mxu0 %v854
        %911 = vmatprep.subr.bf16.mxu0 0
        %912 = vmatpush2.bf16.msra.mxu0 %v853
        %913 = vmatprep.subr.bf16.mxu0 0
        %914 = vmatpush2.bf16.msra.mxu0 %v852
        %915 = vmatprep.subr.bf16.mxu0 0
        %916 = vmatpush2.bf16.msra.mxu0 %v851
        %917 = vmatprep.subr.bf16.mxu0 0
        %918 = vmatpush2.bf16.msra.mxu0 %v850
        %919 = vmatprep.subr.bf16.mxu0 0
        %920 = vmatpush2.bf16.msra.mxu0 %v849
        %921 = vmatprep.mubr.bf16.mxu0 %v688
        %922 = vmatmul.mubr.bf16.gmra.mxu0 %v687
        %v923 = vpop.f32.mrf.mxu0
        %v924 = vadd.f32 %v743, %v923
        %v925 = vpop.f32.mrf.mxu0
        %v926 = vpop.f32.mrf.mxu0
        %v927 = vadd.f32 %v743, %v926
        %v928 = vpop.f32.mrf.mxu0
        %929 = vdwg.mxu0
        %930 = vmatprep.subr.bf16.mxu0 0
        %931 = vmatpush1.bf16.msra.mxu0 %v864
        %932 = vmatprep.subr.bf16.mxu0 0
        %933 = vmatpush1.bf16.msra.mxu0 %v863
        %934 = vmatprep.subr.bf16.mxu0 0
        %935 = vmatpush1.bf16.msra.mxu0 %v862
        %936 = vmatprep.subr.bf16.mxu0 0
        %937 = vmatpush1.bf16.msra.mxu0 %v861
        %938 = vmatprep.subr.bf16.mxu0 0
        %939 = vmatpush1.bf16.msra.mxu0 %v860
        %940 = vmatprep.subr.bf16.mxu0 0
        %941 = vmatpush1.bf16.msra.mxu0 %v859
        %942 = vmatprep.subr.bf16.mxu0 0
        %943 = vmatpush1.bf16.msra.mxu0 %v858
        %944 = vmatprep.subr.bf16.mxu0 0
        %945 = vmatpush1.bf16.msra.mxu0 %v857
        %946 = vmatprep.subr.bf16.mxu0 0
        %947 = vmatpush2.bf16.msra.mxu0 0
        %948 = vmatprep.subr.bf16.mxu0 0
        %949 = vmatpush2.bf16.msra.mxu0 0
        %950 = vmatprep.subr.bf16.mxu0 0
        %951 = vmatpush2.bf16.msra.mxu0 0
        %952 = vmatprep.subr.bf16.mxu0 0
        %953 = vmatpush2.bf16.msra.mxu0 0
        %954 = vmatprep.subr.bf16.mxu0 0
        %955 = vmatpush2.bf16.msra.mxu0 0
        %956 = vmatprep.subr.bf16.mxu0 0
        %957 = vmatpush2.bf16.msra.mxu0 0
        %958 = vmatprep.subr.bf16.mxu0 0
        %959 = vmatpush2.bf16.msra.mxu0 0
        %960 = vmatprep.subr.bf16.mxu0 0
        %961 = vmatpush2.bf16.msra.mxu0 0
        %962 = vmatprep.mubr.bf16.mxu0 0
        %963 = vmatmul.mubr.bf16.gmra.mxu0 %v689
        %v964 = vpop.f32.mrf.mxu0
        %v965 = vadd.f32 %v924, %v964
        %v966 = vpop.f32.mrf.mxu0
        %v967 = vpop.f32.mrf.mxu0
        %v968 = vadd.f32 %v927, %v967
        %v969 = vpop.f32.mrf.mxu0
        %970 = vdwg.mxu0
        %v971 = vmul.f32 %v965, %v313
        %v972 = vmul.f32 %v968, %v318
        %973 = vst [vmem:[%s291] sm:$0xff] %v971
        %974 = vst [vmem:[%s291 + $0x8] sm:$0xff] %v972
        %s975 = sand.u32 %s166, 1
        %s976 = scalar_lea.sflag [#allocation4], %s975
        %s977 = sand.u32 %s166, 1
        %s978 = smul.addr %s977, 16
        %s979 = scalar_lea.vmem [#allocation7], %s978
        // Predicated region
        $region53: #{tpu_custom_call.1} parent=43 // pred_check
          %p980 = pneg %p176
        $region54: #{tpu_custom_call.1} parent=43 // pred_check_branch
          %982 = sbr.rel (%p980) target = $region56
        $region55: #{tpu_custom_call.1} parent=43 // pred_region
          %s983 = smul.u32 2, %s22
          %s985 = ssub.s32 256, 256
          %986 = vsyncadd %s976, %s985
          %s987 = smul.addr %s983, 128
          %s988 = scalar_lea.hbm %s6, %s987
          %s989 = sshll.u32 %s979, 4
          %s990 = int_to_ptr.vmem [resolvable:$true] %s989
          %995 = dma.vmem_to_hbm [thread:$0]  %s990, 256, %s988, %s976, 128, 128, 8
        $region56: #{tpu_custom_call.1} parent=43 // pred_fallthru
          _
      $region44: #{tpu_custom_call.1} parent=5 // pred_fallthru
        _
      %p996 = scmp.le.s32.totalorder 2, %s17
      // Predicated region
      $region57: #{tpu_custom_call.1} parent=5 // pred_check
        %p997 = pneg %p996
      $region58: #{tpu_custom_call.1} parent=5 // pred_check_branch
        %999 = sbr.rel (%p997) target = $region60
      $region59: #{tpu_custom_call.1} parent=5 // pred_region
        %s1000 = ssub.s32 %s17, 2
        // Predicated region
        $region61: #{tpu_custom_call.1} parent=59 // pred_check
          %p1001 = pneg %p182
        $region62: #{tpu_custom_call.1} parent=59 // pred_check_branch
          %1003 = sbr.rel (%p1001) target = $region64
        $region63: #{tpu_custom_call.1} parent=59 // pred_region
          %s1004 = sand.u32 %s167, 1
          %s1005 = scalar_lea.sflag [#allocation4], %s1004
          %s1006 = sand.u32 %s167, 1
          %s1007 = smul.addr %s1006, 16
          %s1008 = scalar_lea.vmem [#allocation7], %s1007
          %1009 = dma.done %s1005, 256
        $region64: #{tpu_custom_call.1} parent=59 // pred_fallthru
          _
      $region60: #{tpu_custom_call.1} parent=5 // pred_fallthru
        _
    $region6: #{tpu_custom_call.1} parent=1 // loop_footer
      %s21 = sadd.s32 1, %s17
    $region7: #{tpu_custom_call.1} parent=1 // loop_footer_branch
      %16 = sbr.rel target = $region3
    $region8: #{tpu_custom_call.1} parent=1 // loop_exit
      _
    %1010 = vsyncpa [#allocation3], 1
    %s1011 = scalar_lea.sflag [#allocation3], 1
    %1012 = vsyncpa %s1011, 1
    %1013 = vsyncpa [#allocation6], 1
    %1014 = vsyncpa [#allocation4], 1
    %s1015 = scalar_lea.sflag [#allocation4], 1
    %1016 = vsyncpa %s1015, 1

</llo_original>
